<compile_context>
chip_gen: v7x
topology: tpu7x:2x2x1
jax: 0.10.0
libtpu: 0.0.40
codegen_flags: <defaults>
</compile_context>

<pallas_src>
import math

import jax
import jax.numpy as jnp
from jax.experimental import pallas as pl
from jax.experimental.pallas import tpu as pltpu

_EPS = 1e-5
_VMEM_LIMIT = 48 * 1024 * 1024          # <= v7x 64 MiB physical VMEM
_COMPUTE_DTYPE = jnp.bfloat16           # MXU inputs; norm/relu/tanh stay fp32


# ----------------------------------------------------------------------------
# In-kernel helpers (all value-level: no exotic ref indexers).
# ----------------------------------------------------------------------------
def _pad_hw(x, p, mode):
    """Pad a (H, W, C) value by p on H and W. mode in {"reflect", "zero"}."""
    if p == 0:
        return x
    H, W, C = x.shape
    if mode == "reflect":
        top = [x[p - r:p - r + 1] for r in range(p)]          # rows p, ..., 1
        bot = [x[H - 2 - r:H - 1 - r] for r in range(p)]      # rows H-2, ...
    else:
        z = jnp.zeros((p, W, C), x.dtype)
        top, bot = [z], [z]
    x = jnp.concatenate(top + [x] + bot, axis=0)
    Hp = H + 2 * p
    if mode == "reflect":
        left = [x[:, p - r:p - r + 1, :] for r in range(p)]
        right = [x[:, W - 2 - r:W - 1 - r, :] for r in range(p)]
    else:
        z = jnp.zeros((Hp, p, C), x.dtype)
        left, right = [z], [z]
    return jnp.concatenate(left + [x] + right, axis=1)


def _instance_norm(y):
    """InstanceNorm2d (affine=False, biased variance) on a (H*W, C) value."""
    mean = jnp.mean(y, axis=0, keepdims=True)
    var = jnp.mean(jnp.square(y - mean), axis=0, keepdims=True)
    return (y - mean) * jax.lax.rsqrt(var + _EPS)


def _conv_fold_kw(xpad, w_ref, KH, KW, Ho, Wo):
    """Conv as KH matmuls with the KW taps folded into the contraction.

    xpad : (Hp, Wp, Cin) value in compute dtype.
    w_ref: (KH, KW*Cin, Cout) ref (bf16).
    Returns (Ho*Wo, Cout) fp32.
    """
    Cin = xpad.shape[-1]
    Cout = w_ref.shape[-1]
    acc = jnp.zeros((Ho * Wo, Cout), jnp.float32)
    for kh in range(KH):
        row = xpad[kh:kh + Ho]                                # (Ho, Wp, Cin)
        if KW == 1:
            win = row[:, :Wo, :]
        else:
            win = jnp.concatenate(
                [row[:, kw:kw + Wo, :] for kw in range(KW)], axis=-1)
        acc = acc + jnp.dot(win.reshape(Ho * Wo, KW * Cin), w_ref[kh],
                            preferred_element_type=jnp.float32)
    return acc


# ----------------------------------------------------------------------------
# Fused Conv (+bias) + InstanceNorm + ReLU / Tanh kernel (one batch el / step).
# ----------------------------------------------------------------------------
def _make_conv_kernel(KH, KW, pad, pad_mode, Ho, Wo,
                      do_norm, do_relu, do_tanh):
    def kernel(x_ref, w_ref, b_ref, o_ref):
        x = x_ref[0]                                          # (H, W, Cin) f32
        xpad = _pad_hw(x, pad, pad_mode).astype(_COMPUTE_DTYPE)
        y = _conv_fold_kw(xpad, w_ref, KH, KW, Ho, Wo) + b_ref[...]
        if do_norm:
            y = _instance_norm(y)
        if do_relu:
            y = jnp.maximum(y, 0.0)
        if do_tanh:
            y = jnp.tanh(y)
        Cout = o_ref.shape[-1]
        o_ref[...] = y.reshape(1, Ho, Wo, Cout).astype(o_ref.dtype)
    return kernel


# ----------------------------------------------------------------------------
# Fully fused ResidualBlock kernel: RPad1->Conv3->IN->ReLU->RPad1->Conv3->IN;+x
# The intermediate h stays on-chip (never written to HBM).
# ----------------------------------------------------------------------------
def _make_resblock_kernel(Hh, Ww, C):
    def kernel(x_ref, w1_ref, b1_ref, w2_ref, b2_ref, o_ref):
        x = x_ref[0]                                          # (Hh, Ww, C) f32
        xpad = _pad_hw(x, 1, "reflect").astype(_COMPUTE_DTYPE)
        h = _conv_fold_kw(xpad, w1_ref, 3, 3, Hh, Ww) + b1_ref[...]
        h = jnp.maximum(_instance_norm(h), 0.0)               # fp32
        hpad = _pad_hw(h.reshape(Hh, Ww, C), 1, "reflect").astype(_COMPUTE_DTYPE)
        y = _conv_fold_kw(hpad, w2_ref, 3, 3, Hh, Ww) + b2_ref[...]
        y = _instance_norm(y) + x.reshape(Hh * Ww, C)         # residual in fp32
        o_ref[...] = y.reshape(1, Hh, Ww, C).astype(o_ref.dtype)
    return kernel


# ----------------------------------------------------------------------------
# pallas_call wrappers
# ----------------------------------------------------------------------------
def _compiler_params():
    return pltpu.CompilerParams(
        dimension_semantics=("parallel",),        # batch axis -> 2 TCs on v7x
        vmem_limit_bytes=_VMEM_LIMIT,
    )


def conv_block(x, w, b, *, KH, KW, pad=0, pad_mode="zero",
               do_norm=False, do_relu=False, do_tanh=False):
    """x: (N, H, W, Cin) f32 (unpadded); w: (KH, KW*Cin, Cout) bf16; b: (Cout,)."""
    N, H, W, Cin = x.shape
    KH_, KWC, Cout = w.shape
    assert KH_ == KH and KWC == KW * Cin
    Ho = H + 2 * pad - KH + 1
    Wo = W + 2 * pad - KW + 1

    kernel = _make_conv_kernel(KH, KW, pad, pad_mode, Ho, Wo,
                               do_norm, do_relu, do_tanh)
    return pl.pallas_call(
        kernel,
        out_shape=jax.ShapeDtypeStruct((N, Ho, Wo, Cout), jnp.float32),
        grid=(N,),
        in_specs=[
            pl.BlockSpec((1, H, W, Cin), lambda n: (n, 0, 0, 0)),
            pl.BlockSpec((KH, KW * Cin, Cout), lambda n: (0, 0, 0)),
            pl.BlockSpec((1, Cout), lambda n: (0, 0)),
        ],
        out_specs=pl.BlockSpec((1, Ho, Wo, Cout), lambda n: (n, 0, 0, 0)),
        compiler_params=_compiler_params(),
    )(x, w, b.reshape(1, Cout).astype(jnp.float32))


def res_block(x, w1, b1, w2, b2):
    """Fused ResidualBlock. x: (N, H, W, C) f32; w*: (3, 3*C, C) bf16."""
    N, H, W, C = x.shape
    kernel = _make_resblock_kernel(H, W, C)
    return pl.pallas_call(
        kernel,
        out_shape=jax.ShapeDtypeStruct((N, H, W, C), jnp.float32),
        grid=(N,),
        in_specs=[
            pl.BlockSpec((1, H, W, C), lambda n: (n, 0, 0, 0)),
            pl.BlockSpec((3, 3 * C, C), lambda n: (0, 0, 0)),
            pl.BlockSpec((1, C), lambda n: (0, 0)),
            pl.BlockSpec((3, 3 * C, C), lambda n: (0, 0, 0)),
            pl.BlockSpec((1, C), lambda n: (0, 0)),
        ],
        out_specs=pl.BlockSpec((1, H, W, C), lambda n: (n, 0, 0, 0)),
        compiler_params=_compiler_params(),
    )(x, w1, b1.reshape(1, C).astype(jnp.float32),
      w2, b2.reshape(1, C).astype(jnp.float32))


# ----------------------------------------------------------------------------
# Wrapper-side layout glue (pure data movement / weight re-layouts).
# ----------------------------------------------------------------------------
def _fold_w(w):
    """(KH, KW, Cin, Cout) -> (KH, KW*Cin, Cout) bf16 (matches in-kernel concat)."""
    KH, KW, Cin, Cout = w.shape
    return w.reshape(KH, KW * Cin, Cout).astype(_COMPUTE_DTYPE)


def _s2d_weights(w):
    """Rewrite a 3x3 stride-2 conv as a 2x2 stride-1 conv over s2d(2) input."""
    KH, KW, Cin, Cout = w.shape
    assert KH == 3 and KW == 3
    w4 = jnp.zeros((2, 2, 2, 2, Cin, Cout), w.dtype)
    for kh in range(3):
        for kw in range(3):
            w4 = w4.at[kh // 2, kw // 2, kh % 2, kw % 2].set(w[kh, kw])
    return w4.reshape(2, 2, 4 * Cin, Cout)


def _s2d_input(xp):
    """(N, Hp, Wp, C) with Hp, Wp even -> (N, Hp//2, Wp//2, 4*C), phase-major."""
    N, Hp, Wp, C = xp.shape
    x4 = xp.reshape(N, Hp // 2, 2, Wp // 2, 2, C).transpose(0, 1, 3, 2, 4, 5)
    return x4.reshape(N, Hp // 2, Wp // 2, 4 * C)


def _im2col_7x7(x, pad):
    """Full KH*KW fold in the wrapper (only for the tiny-Cin input conv)."""
    N, H, W, C = x.shape
    Ho = H + 2 * pad - 6
    Wo = W + 2 * pad - 6
    xp = jnp.pad(x, ((0, 0), (pad, pad), (pad, pad), (0, 0)), mode="reflect")
    cols = [xp[:, kh:kh + Ho, kw:kw + Wo, :]
            for kh in range(7) for kw in range(7)]
    return jnp.concatenate(cols, axis=-1)                 # (N, Ho, Wo, 49*C)


def _upsample2(x):
    # TODO(synk): fold the nearest-neighbour upsample into the up-conv kernel
    # (phase-decomposed taps) to avoid the 4x HBM intermediate.
    return jnp.repeat(jnp.repeat(x, 2, axis=1), 2, axis=2)


def _round_up(v, m):
    return (v + m - 1) // m * m


# ----------------------------------------------------------------------------
# GeneratorResNet forward (Pallas path)
# ----------------------------------------------------------------------------
def generator_forward(x_nchw, params, num_res_blocks):
    channels = x_nchw.shape[1]
    x = jnp.transpose(x_nchw, (0, 2, 3, 1)).astype(jnp.float32)   # NCHW->NHWC

    # initial block: ReflectionPad(channels) -> Conv7 -> IN -> ReLU.
    # Cin=3 is too small to feed the MXU, so all 49 taps are folded into the
    # contraction (single K=49*Cin matmul per image).
    w, b = params["init"]
    xi = _im2col_7x7(x, channels)
    x = conv_block(xi, w.reshape(1, 49 * channels, -1).astype(_COMPUTE_DTYPE),
                   b, KH=1, KW=1, pad=0, do_norm=True, do_relu=True)

    # downsampling: Conv3 s2 p1 -> IN -> ReLU, expressed as a stride-1 2x2 conv
    # over a space-to-depth input (no strided ref reads, 4x larger matmul K).
    for i in range(2):
        w, b = params["down"][i]
        xp = jnp.pad(x, ((0, 0), (1, 1), (1, 1), (0, 0)))
        x = conv_block(_s2d_input(xp), _fold_w(_s2d_weights(w)), b,
                       KH=2, KW=2, pad=0, do_norm=True, do_relu=True)

    # residual blocks: both convs + IN + ReLU + residual fused per block.
    for i in range(num_res_blocks):
        (w1, b1), (w2, b2) = params["res"][i]
        x = res_block(x, _fold_w(w1), b1, _fold_w(w2), b2)

    # upsampling: Upsample x2 -> Conv3 s1 p1 -> IN -> ReLU (zero pad in-kernel).
    for i in range(2):
        w, b = params["up"][i]
        x = conv_block(_upsample2(x), _fold_w(w), b,
                       KH=3, KW=3, pad=1, pad_mode="zero",
                       do_norm=True, do_relu=True)

    # output: ReflectionPad(channels) -> Conv7 -> Tanh.  Cout lane-padded to
    # 128 for lane-dense stores, sliced back afterwards.
    w, b = params["final"]
    Cout = w.shape[-1]
    Cpad = _round_up(Cout, 128)
    wp = jnp.pad(w, ((0, 0), (0, 0), (0, 0), (0, Cpad - Cout)))
    bp = jnp.pad(b, (0, Cpad - Cout))
    x = conv_block(x, _fold_w(wp), bp, KH=7, KW=7, pad=channels,
                   pad_mode="reflect", do_tanh=True)
    x = x[..., :Cout]

    return jnp.transpose(x, (0, 3, 1, 2))                        # NHWC->NCHW


# ----------------------------------------------------------------------------
# Pure-JAX reference of the same network (bf16 matmul inputs, fp32 elsewhere).
# ----------------------------------------------------------------------------
def ref_forward(x_nchw, params, num_res_blocks):
    channels = x_nchw.shape[1]
    x = jnp.transpose(x_nchw, (0, 2, 3, 1)).astype(jnp.float32)

    def conv(x, w, b, stride=1):
        y = jax.lax.conv_general_dilated(
            x.astype(_COMPUTE_DTYPE), w.astype(_COMPUTE_DTYPE),
            (stride, stride), "VALID",
            dimension_numbers=("NHWC", "HWIO", "NHWC"),
            preferred_element_type=jnp.float32)
        return y + b.reshape(1, 1, 1, -1)

    def inorm(y):
        m = jnp.mean(y, axis=(1, 2), keepdims=True)
        v = jnp.mean(jnp.square(y - m), axis=(1, 2), keepdims=True)
        return (y - m) * jax.lax.rsqrt(v + _EPS)

    def rpad(x, p):
        return jnp.pad(x, ((0, 0), (p, p), (p, p), (0, 0)), mode="reflect")

    def zpad(x, p):
        return jnp.pad(x, ((0, 0), (p, p), (p, p), (0, 0)))

    w, b = params["init"]
    x = jnp.maximum(inorm(conv(rpad(x, channels), w, b)), 0.0)
    for i in range(2):
        w, b = params["down"][i]
        x = jnp.maximum(inorm(conv(zpad(x, 1), w, b, 2)), 0.0)
    for i in range(num_res_blocks):
        (w1, b1), (w2, b2) = params["res"][i]
        h = jnp.maximum(inorm(conv(rpad(x, 1), w1, b1)), 0.0)
        x = x + inorm(conv(rpad(h, 1), w2, b2))
    for i in range(2):
        w, b = params["up"][i]
        x = jnp.repeat(jnp.repeat(x, 2, axis=1), 2, axis=2)
        x = jnp.maximum(inorm(conv(zpad(x, 1), w, b)), 0.0)
    w, b = params["final"]
    x = jnp.tanh(conv(rpad(x, channels), w, b))
    return jnp.transpose(x, (0, 3, 1, 2))


# ----------------------------------------------------------------------------
# Deterministic parameter init (shapes follow the nn.Module __init__).
# ----------------------------------------------------------------------------
def init_params(key, channels, num_res_blocks):
    def conv(k, kh, kw, cin, cout):
        kw_, kb_ = jax.random.split(k)
        scale = 1.0 / math.sqrt(kh * kw * cin)
        return (jax.random.normal(kw_, (kh, kw, cin, cout), jnp.float32) * scale,
                jax.random.normal(kb_, (cout,), jnp.float32) * scale)

    keys = iter(jax.random.split(key, 6 + 2 * num_res_blocks))
    params = {
        "init": conv(next(keys), 7, 7, channels, 64),
        "down": [conv(next(keys), 3, 3, 64, 128),
                 conv(next(keys), 3, 3, 128, 256)],
        "res": [(conv(next(keys), 3, 3, 256, 256),
                 conv(next(keys), 3, 3, 256, 256))
                for _ in range(num_res_blocks)],
        "up": [conv(next(keys), 3, 3, 256, 128),
               conv(next(keys), 3, 3, 128, 64)],
        "final": conv(next(keys), 7, 7, 64, channels),
    }
    return params


if __name__ == "__main__":
    N, channels, H, W = 2, 3, 16, 16
    num_res_blocks = 2

    key = jax.random.PRNGKey(0)
    kx, kp = jax.random.split(key)
    x = jax.random.normal(kx, (N, channels, H, W), jnp.float32)
    params = init_params(kp, channels, num_res_blocks)

    out = generator_forward(x, params, num_res_blocks)
    out = jax.block_until_ready(out)
    assert out.shape == (N, channels, H, W), out.shape

    ref = ref_forward(x, params, num_res_blocks)
    ref = jax.block_until_ready(ref)
    err = float(jnp.max(jnp.abs(out - ref)))
    # Both paths use bf16 matmul inputs with fp32 accumulation; remaining delta
    # is bf16 rounding / accumulation-order noise through ~16 conv layers.
    assert err < 5e-2, f"Pallas vs reference mismatch: max abs err {err}"

    print("KERNEL_OK")
</pallas_src>

<mosaic_0001>
module attributes {stable_mosaic.version = 11 : i64} {
  func.func @kernel(%arg0: i32, %arg1: memref<1x16x16x147xf32, #tpu.memory_space<vmem>>, %arg2: memref<1x147x64xbf16, #tpu.memory_space<vmem>>, %arg3: memref<1x64xf32, #tpu.memory_space<vmem>>, %arg4: memref<1x16x16x64xf32, #tpu.memory_space<vmem>>) attributes {dimension_semantics = [#tpu.dimension_semantics<parallel>], iteration_bounds = array<i64: 2>, scalar_prefetch = 0 : i64, scratch_operands = 0 : i64, tpu.core_type = #tpu.core_type<tc>, window_params = [{transform_indices = @transform_0, window_bounds = array<i64: 1, 16, 16, 147>}, {pipeline_mode = #tpu.pipeline_mode<synchronous>, transform_indices = @transform_1, window_bounds = array<i64: 1, 147, 64>}, {pipeline_mode = #tpu.pipeline_mode<synchronous>, transform_indices = @transform_2, window_bounds = array<i64: 1, 64>}, {transform_indices = @transform_3, window_bounds = array<i64: 1, 16, 16, 64>}]} {
    %c0 = arith.constant 0 : index
    %c0_0 = arith.constant 0 : index
    %c0_1 = arith.constant 0 : index
    %c0_2 = arith.constant 0 : index
    %0 = vector.load %arg1[%c0, %c0_0, %c0_1, %c0_2] : memref<1x16x16x147xf32, #tpu.memory_space<vmem>>, vector<1x16x16x147xf32>
    %1 = vector.shape_cast %0 : vector<1x16x16x147xf32> to vector<16x16x147xf32>
    %2 = arith.truncf %1 : vector<16x16x147xf32> to vector<16x16x147xbf16>
    %cst = arith.constant 0.000000e+00 : f32
    %3 = vector.broadcast %cst : f32 to vector<256x64xf32>
    %4 = vector.shape_cast %2 : vector<16x16x147xbf16> to vector<256x147xbf16>
    %c0_3 = arith.constant 0 : index
    %c0_4 = arith.constant 0 : index
    %c0_5 = arith.constant 0 : index
    %5 = vector.load %arg2[%c0_3, %c0_4, %c0_5] : memref<1x147x64xbf16, #tpu.memory_space<vmem>>, vector<1x147x64xbf16>
    %6 = vector.shape_cast %5 : vector<1x147x64xbf16> to vector<147x64xbf16>
    %cst_6 = arith.constant dense<0.000000e+00> : vector<256x64xf32>
    %7 = tpu.matmul %4, %6, %cst_6 {dimension_numbers = #tpu.dot_dimension_numbers<[1], [0], [0], [1], [0, 0, 1, 1], [], []>} : vector<256x147xbf16>, vector<147x64xbf16>, vector<256x64xf32> -> vector<256x64xf32>
    %8 = arith.addf %3, %7 : vector<256x64xf32>
    %c0_7 = arith.constant 0 : index
    %c0_8 = arith.constant 0 : index
    %9 = vector.load %arg3[%c0_7, %c0_8] : memref<1x64xf32, #tpu.memory_space<vmem>>, vector<1x64xf32>
    %10 = vector.broadcast %9 : vector<1x64xf32> to vector<256x64xf32>
    %11 = arith.addf %8, %10 : vector<256x64xf32>
    %cst_9 = arith.constant dense<0.000000e+00> : vector<64xf32>
    %12 = vector.multi_reduction <add>, %11, %cst_9 [0] : vector<256x64xf32> to vector<64xf32>
    %13 = vector.shape_cast %12 : vector<64xf32> to vector<1x64xf32>
    %cst_10 = arith.constant 2.560000e+02 : f32
    %14 = vector.broadcast %cst_10 : f32 to vector<1x64xf32>
    %15 = arith.divf %13, %14 : vector<1x64xf32>
    %16 = vector.broadcast %15 : vector<1x64xf32> to vector<256x64xf32>
    %17 = arith.subf %11, %16 : vector<256x64xf32>
    %18 = arith.mulf %17, %17 : vector<256x64xf32>
    %cst_11 = arith.constant dense<0.000000e+00> : vector<64xf32>
    %19 = vector.multi_reduction <add>, %18, %cst_11 [0] : vector<256x64xf32> to vector<64xf32>
    %20 = vector.shape_cast %19 : vector<64xf32> to vector<1x64xf32>
    %cst_12 = arith.constant 2.560000e+02 : f32
    %21 = vector.broadcast %cst_12 : f32 to vector<1x64xf32>
    %22 = arith.divf %20, %21 : vector<1x64xf32>
    %23 = vector.broadcast %15 : vector<1x64xf32> to vector<256x64xf32>
    %24 = arith.subf %11, %23 : vector<256x64xf32>
    %cst_13 = arith.constant 9.99999974E-6 : f32
    %25 = vector.broadcast %cst_13 : f32 to vector<1x64xf32>
    %26 = arith.addf %22, %25 : vector<1x64xf32>
    %27 = math.rsqrt %26 : vector<1x64xf32>
    %28 = vector.broadcast %27 : vector<1x64xf32> to vector<256x64xf32>
    %29 = arith.mulf %24, %28 : vector<256x64xf32>
    %cst_14 = arith.constant 0.000000e+00 : f32
    %30 = vector.broadcast %cst_14 : f32 to vector<256x64xf32>
    %31 = arith.maximumf %29, %30 : vector<256x64xf32>
    %32 = vector.shape_cast %31 : vector<256x64xf32> to vector<1x16x16x64xf32>
    %c0_15 = arith.constant 0 : index
    %c0_16 = arith.constant 0 : index
    %c0_17 = arith.constant 0 : index
    %c0_18 = arith.constant 0 : index
    %33 = vector.load %arg4[%c0_15, %c0_16, %c0_17, %c0_18] : memref<1x16x16x64xf32, #tpu.memory_space<vmem>>, vector<1x16x16x64xf32>
    tpu.vector_store %arg4[%c0_15, %c0_16, %c0_17, %c0_18], %32 {strides = array<i32>} : memref<1x16x16x64xf32, #tpu.memory_space<vmem>>, vector<1x16x16x64xf32>,
    return
  }
  func.func @transform_0(%arg0: i32) -> (i32, i32, i32, i32) {
    %c0_i32 = arith.constant 0 : i32
    %c0_i32_0 = arith.constant 0 : i32
    %c0_i32_1 = arith.constant 0 : i32
    %c0_i32_2 = arith.constant 0 : i32
    return %arg0, %c0_i32, %c0_i32_0, %c0_i32_1 : i32, i32, i32, i32
  }
  func.func @transform_1(%arg0: i32) -> (i32, i32, i32) {
    %c0_i32 = arith.constant 0 : i32
    %c0_i32_0 = arith.constant 0 : i32
    %c0_i32_1 = arith.constant 0 : i32
    %c0_i32_2 = arith.constant 0 : i32
    return %c0_i32, %c0_i32_0, %c0_i32_1 : i32, i32, i32
  }
  func.func @transform_2(%arg0: i32) -> (i32, i32) {
    %c0_i32 = arith.constant 0 : i32
    %c0_i32_0 = arith.constant 0 : i32
    %c0_i32_1 = arith.constant 0 : i32
    return %c0_i32, %c0_i32_0 : i32, i32
  }
  func.func @transform_3(%arg0: i32) -> (i32, i32, i32, i32) {
    %c0_i32 = arith.constant 0 : i32
    %c0_i32_0 = arith.constant 0 : i32
    %c0_i32_1 = arith.constant 0 : i32
    %c0_i32_2 = arith.constant 0 : i32
    return %arg0, %c0_i32, %c0_i32_0, %c0_i32_1 : i32, i32, i32, i32
  }
}

</mosaic_0001>

<llo_original>
// kernel: tpu_custom_call.1
$region0: #{tpu_custom_call.1}
  #allocation0 [shape = 'u32[]', space=smem, size = 0x4, offset = 0x4, fixed_abs, tag = 'smem constant byte address 0x4 - core index']
  #allocation1 [shape = 'u32[144,128]{1,0:T(1,128)}', space=vmem, size = 0x12000, scoped, tag = 'internal scratch']
  %s0 = inlined_call_operand.hbm [shape: f32[2,16,16,147], index: 0, kind: input, shape index: {}]
  %s1 = inlined_call_operand.vmem [shape: bf16[1,147,64], index: 1, kind: input, shape index: {}]
  %s2 = inlined_call_operand.vmem [shape: f32[1,64], index: 2, kind: input, shape index: {}]
  %s3 = inlined_call_operand.hbm [shape: f32[2,16,16,64], index: 3, kind: output, shape index: {}]
  %s4 = sld [smem:[#allocation0]]
  $region49: #{tpu_custom_call.1} parent=0
    _
  %s6 = ssub.s32 1, %s4
  %s7 = scalar_select 0, %s6, %s4
  $region1: #{tpu_custom_call.1} parent=0
    #allocation2 [shape = 'u8[524288]{0}', space=vmem, size = 0x80000, scoped, tag = 'input window, operand 0']
    #allocation3 [shape = 's32[2]{0}', space=sflag, size = 0x8, scoped, tag = 'scoped memory for tpu_custom_call.1']
    #allocation4 [shape = 's32[2]{0}', space=sflag, size = 0x8, scoped, tag = 'scoped memory for tpu_custom_call.1']
    #allocation5 [shape = 'u8[262144]{0}', space=vmem, size = 0x40000, scoped, tag = 'output window, operand 0']
    %8 = vsyncpa [#allocation3], 0
    %s9 = scalar_lea.sflag [#allocation3], 1
    %10 = vsyncpa %s9, 0
    %11 = vsyncpa [#allocation4], 0
    %s12 = scalar_lea.sflag [#allocation4], 1
    %13 = vsyncpa %s12, 0
    loop: start=0, step=1, limit=4
    $region2: #{tpu_custom_call.1} parent=1 // loop_pre_header
      _
    $region3: #{tpu_custom_call.1} parent=1 // loop_header
      %s15 = sphi 0, %s19
      %p16 = scmp.ge.s32.totalorder %s15, 4
      %s25 = sphi 0, %s27
      %s28 = sphi 0, %s25
      %s29 = sphi 0, %s28
      %s45 = sphi 0, %s29
      %s49 = sphi 0, %s49
      %s51 = sphi 0, %s49
      %s52 = sphi 0, %s51
      %s66 = sphi 0, %s52
      %s70 = sphi 0, %s70
      %s72 = sphi 0, %s70
      %s73 = sphi 0, %s72
      %s87 = sphi 0, %s73
      %s93 = sphi 0, %s95
      %s96 = sphi 0, %s93
      %s97 = sphi 0, %s96
      %s113 = sphi 0, %s97
    $region4: #{tpu_custom_call.1} parent=1 // loop_header_branch
      %18 = sbr.rel (%p16) target = $region8
    $region5: #{tpu_custom_call.1} parent=1 // loop_body
      %s20 = ssub.s32 %s15, 1
      %s21 = ssub.s32 %s15, 2
      %s22 = sadd.s32 %s15, 1
      %s23 = ssub.s32 %s15, %s22
      %p24 = scmp.eq.s32.totalorder %s23, 0
      %s26 = sadd.s32 %s25, 1
      %s27 = scalar_select %p24, %s25, %s26
      %p30 = pneg %p24
      %p31 = scmp.eq.s32.totalorder %s15, 1
      %p32 = por %p30, %p31
      %p33 = scmp.ne.s32.totalorder %s25, %s28
      %p34 = scmp.eq.s32.totalorder %s15, 0
      %p35 = por %p33, %p34
      %p36 = scmp.ne.s32.totalorder %s25, %s28
      %p37 = scmp.eq.s32.totalorder %s20, 1
      %p38 = por %p36, %p37
      %p39 = scmp.ne.s32.totalorder %s28, %s29
      %p40 = scmp.eq.s32.totalorder %s20, 0
      %p41 = por %p39, %p40
      %p42 = scmp.ne.s32.totalorder %s28, %s29
      %p43 = scmp.eq.s32.totalorder %s21, 1
      %p44 = por %p42, %p43
      %p46 = scmp.ne.s32.totalorder %s29, %s45
      %p47 = scmp.eq.s32.totalorder %s21, 0
      %p48 = por %p46, %p47
      %s50 = sadd.s32 %s49, 1
      %p53 = scmp.eq.s32.totalorder %s15, 1
      %p54 = scmp.ne.s32.totalorder %s49, %s51
      %p55 = scmp.eq.s32.totalorder %s15, 0
      %p56 = por %p54, %p55
      %p57 = scmp.ne.s32.totalorder %s49, %s51
      %p58 = scmp.eq.s32.totalorder %s20, 1
      %p59 = por %p57, %p58
      %p60 = scmp.ne.s32.totalorder %s51, %s52
      %p61 = scmp.eq.s32.totalorder %s20, 0
      %p62 = por %p60, %p61
      %p63 = scmp.ne.s32.totalorder %s51, %s52
      %p64 = scmp.eq.s32.totalorder %s21, 1
      %p65 = por %p63, %p64
      %p67 = scmp.ne.s32.totalorder %s52, %s66
      %p68 = scmp.eq.s32.totalorder %s21, 0
      %p69 = por %p67, %p68
      %s71 = sadd.s32 %s70, 1
      %p74 = scmp.eq.s32.totalorder %s15, 1
      %p75 = scmp.ne.s32.totalorder %s70, %s72
      %p76 = scmp.eq.s32.totalorder %s15, 0
      %p77 = por %p75, %p76
      %p78 = scmp.ne.s32.totalorder %s70, %s72
      %p79 = scmp.eq.s32.totalorder %s20, 1
      %p80 = por %p78, %p79
      %p81 = scmp.ne.s32.totalorder %s72, %s73
      %p82 = scmp.eq.s32.totalorder %s20, 0
      %p83 = por %p81, %p82
      %p84 = scmp.ne.s32.totalorder %s72, %s73
      %p85 = scmp.eq.s32.totalorder %s21, 1
      %p86 = por %p84, %p85
      %p88 = scmp.ne.s32.totalorder %s73, %s87
      %p89 = scmp.eq.s32.totalorder %s21, 0
      %p90 = por %p88, %p89
      %s91 = ssub.s32 %s15, %s22
      %p92 = scmp.eq.s32.totalorder %s91, 0
      %s94 = sadd.s32 %s93, 1
      %s95 = scalar_select %p92, %s93, %s94
      %p98 = pneg %p92
      %p99 = scmp.eq.s32.totalorder %s15, 1
      %p100 = por %p98, %p99
      %p101 = scmp.ne.s32.totalorder %s93, %s96
      %p102 = scmp.eq.s32.totalorder %s15, 0
      %p103 = por %p101, %p102
      %p104 = scmp.ne.s32.totalorder %s93, %s96
      %p105 = scmp.eq.s32.totalorder %s20, 1
      %p106 = por %p104, %p105
      %p107 = scmp.ne.s32.totalorder %s96, %s97
      %p108 = scmp.eq.s32.totalorder %s20, 0
      %p109 = por %p107, %p108
      %p110 = scmp.ne.s32.totalorder %s96, %s97
      %p111 = scmp.eq.s32.totalorder %s21, 1
      %p112 = por %p110, %p111
      %p114 = scmp.ne.s32.totalorder %s97, %s113
      %p115 = scmp.eq.s32.totalorder %s21, 0
      %p116 = por %p114, %p115
      %p117 = scmp.le.s32.totalorder 1, %s15
      %p118 = scmp.lt.s32.totalorder %s15, 3
      %p119 = pnand %p117, %p118
      %p120 = pneg %p119
      // Predicated region
      $region9: #{tpu_custom_call.1} parent=5 // pred_check
        _
      $region10: #{tpu_custom_call.1} parent=5 // pred_check_branch
        %122 = sbr.rel (%p119) target = $region12
      $region11: #{tpu_custom_call.1} parent=5 // pred_region
        %s123 = ssub.s32 %s15, 1
        // Predicated region
        $region13: #{tpu_custom_call.1} parent=11 // pred_check
          %p124 = pneg %p62
        $region14: #{tpu_custom_call.1} parent=11 // pred_check_branch
          %126 = sbr.rel (%p124) target = $region16
        $region15: #{tpu_custom_call.1} parent=11 // pred_region
          _
        $region16: #{tpu_custom_call.1} parent=11 // pred_fallthru
          _
        // Predicated region
        $region17: #{tpu_custom_call.1} parent=11 // pred_check
          %p127 = pneg %p83
        $region18: #{tpu_custom_call.1} parent=11 // pred_check_branch
          %129 = sbr.rel (%p127) target = $region20
        $region19: #{tpu_custom_call.1} parent=11 // pred_region
          _
        $region20: #{tpu_custom_call.1} parent=11 // pred_fallthru
          _
      $region12: #{tpu_custom_call.1} parent=5 // pred_fallthru
        _
      %p130 = scmp.lt.s32.totalorder %s15, 2
      // Predicated region
      $region21: #{tpu_custom_call.1} parent=5 // pred_check
        %p131 = pneg %p130
      $region22: #{tpu_custom_call.1} parent=5 // pred_check_branch
        %133 = sbr.rel (%p131) target = $region24
      $region23: #{tpu_custom_call.1} parent=5 // pred_region
        // Predicated region
        $region25: #{tpu_custom_call.1} parent=23 // pred_check
          %p134 = pneg %p35
        $region26: #{tpu_custom_call.1} parent=23 // pred_check_branch
          %136 = sbr.rel (%p134) target = $region28
        $region27: #{tpu_custom_call.1} parent=23 // pred_region
          %s137 = sand.u32 %s25, 1
          %s138 = scalar_lea.sflag [#allocation3], %s137
          %s139 = sand.u32 %s25, 1
          %s140 = smul.addr %s139, 512
          %s141 = scalar_lea.vmem [#allocation2], %s140
          %s143 = ssub.s32 8192, 8192
          %144 = vsyncadd %s138, %s143
          %s145 = smul.addr %s15, 64
          %s146 = smul.addr %s145, 128
          %s147 = scalar_lea.hbm %s0, %s146
          %s148 = sshll.u32 %s141, 4
          %s149 = int_to_ptr.vmem [resolvable:$true] %s148
          %154 = dma.hbm_to_vmem [thread:$0]  %s147, 8192, %s149, %s138, 256, 256, 16
        $region28: #{tpu_custom_call.1} parent=23 // pred_fallthru
          _
      $region24: #{tpu_custom_call.1} parent=5 // pred_fallthru
        _
      %p155 = scmp.le.s32.totalorder 1, %s15
      %p156 = scmp.lt.s32.totalorder %s15, 3
      %p157 = pnand %p155, %p156
      %p158 = pneg %p157
      // Predicated region
      $region29: #{tpu_custom_call.1} parent=5 // pred_check
        _
      $region30: #{tpu_custom_call.1} parent=5 // pred_check_branch
        %160 = sbr.rel (%p157) target = $region32
      $region31: #{tpu_custom_call.1} parent=5 // pred_region
        %s161 = ssub.s32 %s15, 1
        %s162 = sand.u32 %s28, 1
        %s163 = scalar_lea.sflag [#allocation3], %s162
        %s164 = sand.u32 %s28, 1
        %s165 = smul.addr %s164, 512
        %s166 = scalar_lea.vmem [#allocation2], %s165
        // Predicated region
        $region33: #{tpu_custom_call.1} parent=31 // pred_check
          %p167 = pneg %p41
        $region34: #{tpu_custom_call.1} parent=31 // pred_check_branch
          %169 = sbr.rel (%p167) target = $region36
        $region35: #{tpu_custom_call.1} parent=31 // pred_region
          %170 = dma.done %s163, 8192
        $region36: #{tpu_custom_call.1} parent=31 // pred_fallthru
          _
        %s171 = sand.u32 %s28, 1
        %s172 = scalar_lea.sflag [#allocation3], %s171
        %s173 = sand.u32 %s28, 1
        %s174 = smul.addr %s173, 512
        %s175 = scalar_lea.vmem [#allocation2], %s174
        %p176 = pneg %p41
        %p177 = pneg %p38
        %p178 = pneg %p62
        %p179 = pneg %p59
        %p180 = pneg %p83
        %p181 = pneg %p80
        %p182 = pneg %p109
        %p183 = pneg %p106
        %s184 = sand.u32 %s96, 1
        %s185 = scalar_lea.sflag [#allocation4], %s184
        %s186 = sand.u32 %s96, 1
        %s187 = smul.addr %s186, 256
        %s188 = scalar_lea.vmem [#allocation5], %s187
        %v190 = vld [vmem:[%s166] sm:$0xff]
        %v191 = vld [vmem:[%s166 + $0x8] sm:$0xff]
        %v192 = vld [vmem:[%s166 + $0x10] sm:$0xff]
        %v193 = vld [vmem:[%s166 + $0x18] sm:$0xff]
        %v194 = vld [vmem:[%s166 + $0x20] sm:$0xff]
        %v195 = vld [vmem:[%s166 + $0x28] sm:$0xff]
        %v196 = vld [vmem:[%s166 + $0x30] sm:$0xff]
        %v197 = vld [vmem:[%s166 + $0x38] sm:$0xff]
        %v198 = vld [vmem:[%s166 + $0x40] sm:$0xff]
        %v199 = vld [vmem:[%s166 + $0x48] sm:$0xff]
        %v200 = vld [vmem:[%s166 + $0x50] sm:$0xff]
        %v201 = vld [vmem:[%s166 + $0x58] sm:$0xff]
        %v202 = vld [vmem:[%s166 + $0x60] sm:$0xff]
        %v203 = vld [vmem:[%s166 + $0x68] sm:$0xff]
        %v204 = vld [vmem:[%s166 + $0x70] sm:$0xff]
        %v205 = vld [vmem:[%s166 + $0x78] sm:$0xff]
        %v206 = vld [vmem:[%s166 + $0x80] sm:$0xff]
        %v207 = vld [vmem:[%s166 + $0x88] sm:$0xff]
        %v208 = vld [vmem:[%s166 + $0x90] sm:$0xff]
        %v209 = vld [vmem:[%s166 + $0x98] sm:$0xff]
        %v210 = vld [vmem:[%s166 + $0xa0] sm:$0xff]
        %v211 = vld [vmem:[%s166 + $0xa8] sm:$0xff]
        %v212 = vld [vmem:[%s166 + $0xb0] sm:$0xff]
        %v213 = vld [vmem:[%s166 + $0xb8] sm:$0xff]
        %v214 = vld [vmem:[%s166 + $0xc0] sm:$0xff]
        %v215 = vld [vmem:[%s166 + $0xc8] sm:$0xff]
        %v216 = vld [vmem:[%s166 + $0xd0] sm:$0xff]
        %v217 = vld [vmem:[%s166 + $0xd8] sm:$0xff]
        %v218 = vld [vmem:[%s166 + $0xe0] sm:$0xff]
        %v219 = vld [vmem:[%s166 + $0xe8] sm:$0xff]
        %v220 = vld [vmem:[%s166 + $0xf0] sm:$0xff]
        %v221 = vld [vmem:[%s166 + $0xf8] sm:$0xff]
        %v222 = vld [vmem:[%s166 + $0x100] sm:$0xff]
        %v223 = vld [vmem:[%s166 + $0x108] sm:$0xff]
        %v224 = vld [vmem:[%s166 + $0x110] sm:$0xff]
        %v225 = vld [vmem:[%s166 + $0x118] sm:$0xff]
        %v226 = vld [vmem:[%s166 + $0x120] sm:$0xff]
        %v227 = vld [vmem:[%s166 + $0x128] sm:$0xff]
        %v228 = vld [vmem:[%s166 + $0x130] sm:$0xff]
        %v229 = vld [vmem:[%s166 + $0x138] sm:$0xff]
        %v230 = vld [vmem:[%s166 + $0x140] sm:$0xff]
        %v231 = vld [vmem:[%s166 + $0x148] sm:$0xff]
        %v232 = vld [vmem:[%s166 + $0x150] sm:$0xff]
        %v233 = vld [vmem:[%s166 + $0x158] sm:$0xff]
        %v234 = vld [vmem:[%s166 + $0x160] sm:$0xff]
        %v235 = vld [vmem:[%s166 + $0x168] sm:$0xff]
        %v236 = vld [vmem:[%s166 + $0x170] sm:$0xff]
        %v237 = vld [vmem:[%s166 + $0x178] sm:$0xff]
        %v238 = vld [vmem:[%s166 + $0x180] sm:$0xff]
        %v239 = vld [vmem:[%s166 + $0x188] sm:$0xff]
        %v240 = vld [vmem:[%s166 + $0x190] sm:$0xff]
        %v241 = vld [vmem:[%s166 + $0x198] sm:$0xff]
        %v242 = vld [vmem:[%s166 + $0x1a0] sm:$0xff]
        %v243 = vld [vmem:[%s166 + $0x1a8] sm:$0xff]
        %v244 = vld [vmem:[%s166 + $0x1b0] sm:$0xff]
        %v245 = vld [vmem:[%s166 + $0x1b8] sm:$0xff]
        %v246 = vld [vmem:[%s166 + $0x1c0] sm:$0xff]
        %v247 = vld [vmem:[%s166 + $0x1c8] sm:$0xff]
        %v248 = vld [vmem:[%s166 + $0x1d0] sm:$0xff]
        %v249 = vld [vmem:[%s166 + $0x1d8] sm:$0xff]
        %v250 = vld [vmem:[%s166 + $0x1e0] sm:$0xff]
        %v251 = vld [vmem:[%s166 + $0x1e8] sm:$0xff]
        %v252 = vld [vmem:[%s166 + $0x1f0] sm:$0xff]
        %v253 = vld [vmem:[%s166 + $0x1f8] sm:$0xff]
        %v254 = vpack.c.bf16 %v192, %v190
        %v255 = vpack.c.bf16 %v193, %v191
        %v256 = vpack.c.bf16 %v196, %v194
        %v257 = vpack.c.bf16 %v197, %v195
        %v258 = vpack.c.bf16 %v200, %v198
        %v259 = vpack.c.bf16 %v201, %v199
        %v260 = vpack.c.bf16 %v204, %v202
        %v261 = vpack.c.bf16 %v205, %v203
        %v262 = vpack.c.bf16 %v208, %v206
        %v263 = vpack.c.bf16 %v209, %v207
        %v264 = vpack.c.bf16 %v212, %v210
        %v265 = vpack.c.bf16 %v213, %v211
        %v266 = vpack.c.bf16 %v216, %v214
        %v267 = vpack.c.bf16 %v217, %v215
        %v268 = vpack.c.bf16 %v220, %v218
        %v269 = vpack.c.bf16 %v221, %v219
        %v270 = vpack.c.bf16 %v224, %v222
        %v271 = vpack.c.bf16 %v225, %v223
        %v272 = vpack.c.bf16 %v228, %v226
        %v273 = vpack.c.bf16 %v229, %v227
        %v274 = vpack.c.bf16 %v232, %v230
        %v275 = vpack.c.bf16 %v233, %v231
        %v276 = vpack.c.bf16 %v236, %v234
        %v277 = vpack.c.bf16 %v237, %v235
        %v278 = vpack.c.bf16 %v240, %v238
        %v279 = vpack.c.bf16 %v241, %v239
        %v280 = vpack.c.bf16 %v244, %v242
        %v281 = vpack.c.bf16 %v245, %v243
        %v282 = vpack.c.bf16 %v248, %v246
        %v283 = vpack.c.bf16 %v249, %v247
        %v284 = vpack.c.bf16 %v252, %v250
        %v285 = vpack.c.bf16 %v253, %v251
        %v286 = vld [vmem:[%s1] sm:$0xf]
        %v287 = vld [vmem:[%s1 + $0x4] sm:$0xf]
        %v288 = vld [vmem:[%s1 + $0x8] sm:$0xf]
        %v289 = vld [vmem:[%s1 + $0xc] sm:$0xf]
        %v290 = vld [vmem:[%s1 + $0x10] sm:$0xf]
        %v291 = vld [vmem:[%s1 + $0x14] sm:$0xf]
        %v292 = vld [vmem:[%s1 + $0x18] sm:$0xf]
        %v293 = vld [vmem:[%s1 + $0x1c] sm:$0xf]
        %v294 = vld [vmem:[%s1 + $0x20] sm:$0xf]
        %v295 = vld [vmem:[%s1 + $0x24] sm:$0xf]
        %v296 = vld [vmem:[%s1 + $0x28] sm:$0xf]
        %v297 = vld [vmem:[%s1 + $0x2c] sm:$0xf]
        %v298 = vld [vmem:[%s1 + $0x30] sm:$0xf]
        %v299 = vld [vmem:[%s1 + $0x34] sm:$0xf]
        %v300 = vld [vmem:[%s1 + $0x38] sm:$0xf]
        %v301 = vld [vmem:[%s1 + $0x3c] sm:$0xf]
        %v302 = vld [vmem:[%s1 + $0x40] sm:$0xf]
        %v303 = vld [vmem:[%s1 + $0x44] sm:$0xf]
        %v304 = vld [vmem:[%s1 + $0x48] sm:$0x3]
        %v305 = vld [vmem:[%s2] sm:$0x1]
        %v307 = vlaneseq
        %v308 = vshrl.u32 %v307, 7
        %v309 = vsub.s32 0, %v308
        %v310 = vrot.slane %v305, %v309
        %v331 = vunpack.c.l.b16 %v286
        %v332 = vunpack.c.l.b16 %v287
        %v333 = vunpack.c.l.b16 %v288
        %v334 = vunpack.c.l.b16 %v289
        %v335 = vunpack.c.l.b16 %v290
        %v336 = vunpack.c.l.b16 %v291
        %v337 = vunpack.c.l.b16 %v292
        %v338 = vunpack.c.l.b16 %v293
        %v339 = vunpack.c.l.b16 %v294
        %v340 = vunpack.c.l.b16 %v295
        %v341 = vunpack.c.l.b16 %v296
        %v342 = vunpack.c.l.b16 %v297
        %v343 = vunpack.c.l.b16 %v298
        %v344 = vunpack.c.l.b16 %v299
        %v345 = vunpack.c.l.b16 %v300
        %v346 = vunpack.c.l.b16 %v301
        %v347 = vunpack.c.l.b16 %v302
        %v348 = vunpack.c.l.b16 %v303
        %v349 = vunpack.c.l.b16 %v304
        %v350 = vpack.c.b16 %v332, %v331
        %v351 = vpack.c.b16 %v334, %v333
        %v352 = vpack.c.b16 %v336, %v335
        %v353 = vpack.c.b16 %v338, %v337
        %v354 = vpack.c.b16 %v340, %v339
        %v355 = vpack.c.b16 %v342, %v341
        %v356 = vpack.c.b16 %v344, %v343
        %v357 = vpack.c.b16 %v346, %v345
        %v358 = vpack.c.b16 %v348, %v347
        %v359 = vpack.c.b16 %v349, %v349
        %vm369 = vcmask 154624
        %v371 = vsel %vm369, %v255, 0
        %v374 = vsel %vm369, %v257, 0
        %v377 = vsel %vm369, %v259, 0
        %v380 = vsel %vm369, %v261, 0
        %v383 = vsel %vm369, %v263, 0
        %v386 = vsel %vm369, %v265, 0
        %v389 = vsel %vm369, %v267, 0
        %v392 = vsel %vm369, %v269, 0
        %v395 = vsel %vm369, %v271, 0
        %v398 = vsel %vm369, %v273, 0
        %v401 = vsel %vm369, %v275, 0
        %v404 = vsel %vm369, %v277, 0
        %v407 = vsel %vm369, %v279, 0
        %v410 = vsel %vm369, %v281, 0
        %v413 = vsel %vm369, %v283, 0
        %v416 = vsel %vm369, %v285, 0
        %vm418 = vcmask 1040384
        %vm419 = vcmask 1041408
        %v420 = vsel %vm418, 4294967295, 65535
        %v421 = vsel %vm419, %v420, 0
        %v423 = vand.u32 %v359, %v421
        %425 = vmatprep.subr.bf16.mxu0 0
        %426 = vmatpush1.bf16.msra.mxu0 %v350
        %427 = vmatprep.subr.bf16.mxu0 0
        %428 = vmatpush1.bf16.msra.mxu0 %v351
        %429 = vmatprep.subr.bf16.mxu0 0
        %430 = vmatpush1.bf16.msra.mxu0 %v352
        %431 = vmatprep.subr.bf16.mxu0 0
        %432 = vmatpush1.bf16.msra.mxu0 %v353
        %433 = vmatprep.subr.bf16.mxu0 0
        %434 = vmatpush1.bf16.msra.mxu0 %v354
        %435 = vmatprep.subr.bf16.mxu0 0
        %436 = vmatpush1.bf16.msra.mxu0 %v355
        %437 = vmatprep.subr.bf16.mxu0 0
        %438 = vmatpush1.bf16.msra.mxu0 %v356
        %439 = vmatprep.subr.bf16.mxu0 0
        %440 = vmatpush1.bf16.msra.mxu0 %v357
        %441 = vmatprep.subr.bf16.mxu0 0
        %442 = vmatpush1.bf16.msra.mxu0 %v358
        %443 = vmatprep.subr.bf16.mxu0 0
        %444 = vmatpush1.bf16.msra.mxu0 %v423
        %445 = vmatprep.subr.bf16.mxu0 0
        %446 = vmatpush1.bf16.msra.mxu0 0
        %447 = vmatprep.subr.bf16.mxu0 0
        %448 = vmatpush1.bf16.msra.mxu0 0
        %449 = vmatprep.subr.bf16.mxu0 0
        %450 = vmatpush1.bf16.msra.mxu0 0
        %451 = vmatprep.subr.bf16.mxu0 0
        %452 = vmatpush1.bf16.msra.mxu0 0
        %453 = vmatprep.subr.bf16.mxu0 0
        %454 = vmatpush1.bf16.msra.mxu0 0
        %455 = vmatprep.subr.bf16.mxu0 0
        %456 = vmatpush1.bf16.msra.mxu0 0
        %457 = vmatprep.mubr.bf16.mxu0 %v371
        %458 = vmatmul.mubr.bf16.gmra.mrb[0].mxu0 %v254
        %v459 = vpop.f32.mrb[0].mxu0
        %v460 = vadd.f32 %v310, %v459
        %v461 = vpop.f32.mrb[0].mxu0
        %v462 = vpop.f32.mrb[0].mxu0
        %v463 = vadd.f32 %v310, %v462
        %v464 = vpop.f32.mrb[0].mxu0
        %465 = vmatprep.mubr.bf16.mxu0 %v374
        %466 = vmatmul.mubr.bf16.gmra.mrb[0].mxu0 %v256
        %v467 = vpop.f32.mrb[0].mxu0
        %v468 = vadd.f32 %v310, %v467
        %v469 = vpop.f32.mrb[0].mxu0
        %v470 = vpop.f32.mrb[0].mxu0
        %v471 = vadd.f32 %v310, %v470
        %v472 = vpop.f32.mrb[0].mxu0
        %473 = vmatprep.mubr.bf16.mxu0 %v377
        %474 = vmatmul.mubr.bf16.gmra.mrb[0].mxu0 %v258
        %v475 = vpop.f32.mrb[0].mxu0
        %v476 = vadd.f32 %v310, %v475
        %v477 = vpop.f32.mrb[0].mxu0
        %v478 = vpop.f32.mrb[0].mxu0
        %v479 = vadd.f32 %v310, %v478
        %v480 = vpop.f32.mrb[0].mxu0
        %481 = vmatprep.mubr.bf16.mxu0 %v380
        %482 = vmatmul.mubr.bf16.gmra.mrb[0].mxu0 %v260
        %v483 = vpop.f32.mrb[0].mxu0
        %v484 = vadd.f32 %v310, %v483
        %v485 = vpop.f32.mrb[0].mxu0
        %v486 = vpop.f32.mrb[0].mxu0
        %v487 = vadd.f32 %v310, %v486
        %v488 = vpop.f32.mrb[0].mxu0
        %489 = vmatprep.mubr.bf16.mxu0 %v383
        %490 = vmatmul.mubr.bf16.gmra.mrb[0].mxu0 %v262
        %v491 = vpop.f32.mrb[0].mxu0
        %v492 = vadd.f32 %v310, %v491
        %v493 = vpop.f32.mrb[0].mxu0
        %v494 = vpop.f32.mrb[0].mxu0
        %v495 = vadd.f32 %v310, %v494
        %v496 = vpop.f32.mrb[0].mxu0
        %497 = vmatprep.mubr.bf16.mxu0 %v386
        %498 = vmatmul.mubr.bf16.gmra.mrb[0].mxu0 %v264
        %v499 = vpop.f32.mrb[0].mxu0
        %v500 = vadd.f32 %v310, %v499
        %v501 = vpop.f32.mrb[0].mxu0
        %v502 = vpop.f32.mrb[0].mxu0
        %v503 = vadd.f32 %v310, %v502
        %v504 = vpop.f32.mrb[0].mxu0
        %505 = vmatprep.mubr.bf16.mxu0 %v389
        %506 = vmatmul.mubr.bf16.gmra.mrb[0].mxu0 %v266
        %v507 = vpop.f32.mrb[0].mxu0
        %v508 = vadd.f32 %v310, %v507
        %v509 = vpop.f32.mrb[0].mxu0
        %v510 = vpop.f32.mrb[0].mxu0
        %v511 = vadd.f32 %v310, %v510
        %v512 = vpop.f32.mrb[0].mxu0
        %513 = vmatprep.mubr.bf16.mxu0 %v392
        %514 = vmatmul.mubr.bf16.gmra.mrb[0].mxu0 %v268
        %v515 = vpop.f32.mrb[0].mxu0
        %v516 = vadd.f32 %v310, %v515
        %v517 = vpop.f32.mrb[0].mxu0
        %v518 = vpop.f32.mrb[0].mxu0
        %v519 = vadd.f32 %v310, %v518
        %v520 = vpop.f32.mrb[0].mxu0
        %521 = vmatprep.mubr.bf16.mxu0 %v395
        %522 = vmatmul.mubr.bf16.gmra.mrb[0].mxu0 %v270
        %v523 = vpop.f32.mrb[0].mxu0
        %v524 = vadd.f32 %v310, %v523
        %v525 = vpop.f32.mrb[0].mxu0
        %v526 = vpop.f32.mrb[0].mxu0
        %v527 = vadd.f32 %v310, %v526
        %v528 = vpop.f32.mrb[0].mxu0
        %529 = vmatprep.mubr.bf16.mxu0 %v398
        %530 = vmatmul.mubr.bf16.gmra.mrb[0].mxu0 %v272
        %v531 = vpop.f32.mrb[0].mxu0
        %v532 = vadd.f32 %v310, %v531
        %v533 = vpop.f32.mrb[0].mxu0
        %v534 = vpop.f32.mrb[0].mxu0
        %v535 = vadd.f32 %v310, %v534
        %v536 = vpop.f32.mrb[0].mxu0
        %537 = vmatprep.mubr.bf16.mxu0 %v401
        %538 = vmatmul.mubr.bf16.gmra.mrb[0].mxu0 %v274
        %v539 = vpop.f32.mrb[0].mxu0
        %v540 = vadd.f32 %v310, %v539
        %v541 = vpop.f32.mrb[0].mxu0
        %v542 = vpop.f32.mrb[0].mxu0
        %v543 = vadd.f32 %v310, %v542
        %v544 = vpop.f32.mrb[0].mxu0
        %545 = vmatprep.mubr.bf16.mxu0 %v404
        %546 = vmatmul.mubr.bf16.gmra.mrb[0].mxu0 %v276
        %v547 = vpop.f32.mrb[0].mxu0
        %v548 = vadd.f32 %v310, %v547
        %v549 = vpop.f32.mrb[0].mxu0
        %v550 = vpop.f32.mrb[0].mxu0
        %v551 = vadd.f32 %v310, %v550
        %v552 = vpop.f32.mrb[0].mxu0
        %553 = vmatprep.mubr.bf16.mxu0 %v407
        %554 = vmatmul.mubr.bf16.gmra.mrb[0].mxu0 %v278
        %v555 = vpop.f32.mrb[0].mxu0
        %v556 = vadd.f32 %v310, %v555
        %v557 = vpop.f32.mrb[0].mxu0
        %v558 = vpop.f32.mrb[0].mxu0
        %v559 = vadd.f32 %v310, %v558
        %v560 = vpop.f32.mrb[0].mxu0
        %561 = vmatprep.mubr.bf16.mxu0 %v410
        %562 = vmatmul.mubr.bf16.gmra.mrb[0].mxu0 %v280
        %v563 = vpop.f32.mrb[0].mxu0
        %v564 = vadd.f32 %v310, %v563
        %v565 = vpop.f32.mrb[0].mxu0
        %v566 = vpop.f32.mrb[0].mxu0
        %v567 = vadd.f32 %v310, %v566
        %v568 = vpop.f32.mrb[0].mxu0
        %569 = vmatprep.mubr.bf16.mxu0 %v413
        %570 = vmatmul.mubr.bf16.gmra.mrb[0].mxu0 %v282
        %v571 = vpop.f32.mrb[0].mxu0
        %v572 = vadd.f32 %v310, %v571
        %v573 = vpop.f32.mrb[0].mxu0
        %v574 = vpop.f32.mrb[0].mxu0
        %v575 = vadd.f32 %v310, %v574
        %v576 = vpop.f32.mrb[0].mxu0
        %577 = vmatprep.mubr.bf16.mxu0 %v416
        %578 = vmatmul.mubr.bf16.gmra.mrb[0].mxu0 %v284
        %v579 = vpop.f32.mrb[0].mxu0
        %v580 = vadd.f32 %v310, %v579
        %v581 = vpop.f32.mrb[0].mxu0
        %v582 = vpop.f32.mrb[0].mxu0
        %v583 = vadd.f32 %v310, %v582
        %v584 = vpop.f32.mrb[0].mxu0
        %585 = vdwg.mxu0
        %vm586 = vcmask 523264
        %v587 = vsel %vm586, %v460, 0.0
        %v588 = vsel %vm586, %v463, 0.0
        %v589 = vadd.f32 %v587, %v588
        %v590 = vsel %vm586, %v468, 0.0
        %v591 = vadd.f32 %v589, %v590
        %v592 = vsel %vm586, %v471, 0.0
        %v593 = vadd.f32 %v591, %v592
        %v594 = vsel %vm586, %v476, 0.0
        %v595 = vadd.f32 %v593, %v594
        %v596 = vsel %vm586, %v479, 0.0
        %v597 = vadd.f32 %v595, %v596
        %v598 = vsel %vm586, %v484, 0.0
        %v599 = vadd.f32 %v597, %v598
        %v600 = vsel %vm586, %v487, 0.0
        %v601 = vadd.f32 %v599, %v600
        %v602 = vsel %vm586, %v492, 0.0
        %v603 = vadd.f32 %v601, %v602
        %v604 = vsel %vm586, %v495, 0.0
        %v605 = vadd.f32 %v603, %v604
        %v606 = vsel %vm586, %v500, 0.0
        %v607 = vadd.f32 %v605, %v606
        %v608 = vsel %vm586, %v503, 0.0
        %v609 = vadd.f32 %v607, %v608
        %v610 = vsel %vm586, %v508, 0.0
        %v611 = vadd.f32 %v609, %v610
        %v612 = vsel %vm586, %v511, 0.0
        %v613 = vadd.f32 %v611, %v612
        %v614 = vsel %vm586, %v516, 0.0
        %v615 = vadd.f32 %v613, %v614
        %v616 = vsel %vm586, %v519, 0.0
        %v617 = vadd.f32 %v615, %v616
        %v618 = vsel %vm586, %v524, 0.0
        %v619 = vadd.f32 %v617, %v618
        %v620 = vsel %vm586, %v527, 0.0
        %v621 = vadd.f32 %v619, %v620
        %v622 = vsel %vm586, %v532, 0.0
        %v623 = vadd.f32 %v621, %v622
        %v624 = vsel %vm586, %v535, 0.0
        %v625 = vadd.f32 %v623, %v624
        %v626 = vsel %vm586, %v540, 0.0
        %v627 = vadd.f32 %v625, %v626
        %v628 = vsel %vm586, %v543, 0.0
        %v629 = vadd.f32 %v627, %v628
        %v630 = vsel %vm586, %v548, 0.0
        %v631 = vadd.f32 %v629, %v630
        %v632 = vsel %vm586, %v551, 0.0
        %v633 = vadd.f32 %v631, %v632
        %v634 = vsel %vm586, %v556, 0.0
        %v635 = vadd.f32 %v633, %v634
        %v636 = vsel %vm586, %v559, 0.0
        %v637 = vadd.f32 %v635, %v636
        %v638 = vsel %vm586, %v564, 0.0
        %v639 = vadd.f32 %v637, %v638
        %v640 = vsel %vm586, %v567, 0.0
        %v641 = vadd.f32 %v639, %v640
        %v642 = vsel %vm586, %v572, 0.0
        %v643 = vadd.f32 %v641, %v642
        %v644 = vsel %vm586, %v575, 0.0
        %v645 = vadd.f32 %v643, %v644
        %v646 = vsel %vm586, %v580, 0.0
        %v647 = vadd.f32 %v645, %v646
        %v648 = vsel %vm586, %v583, 0.0
        %v649 = vadd.f32 %v647, %v648
        %v650 = vrot.slane %v649, 4
        %v651 = vadd.f32 %v649, %v650
        %v652 = vrot.slane %v651, 2
        %v653 = vadd.f32 %v651, %v652
        %v654 = vrot.slane %v653, 1
        %v655 = vadd.f32 %v653, %v654
        %v656 = vrcp.pop 256.0
        %v657 = vmul.f32 %v655, %v656
        %v658 = vsub.f32 %v460, %v657
        %v659 = vsub.f32 %v463, %v657
        %v660 = vsub.f32 %v468, %v657
        %v661 = vsub.f32 %v471, %v657
        %v662 = vsub.f32 %v476, %v657
        %v663 = vsub.f32 %v479, %v657
        %v664 = vsub.f32 %v484, %v657
        %v665 = vsub.f32 %v487, %v657
        %v666 = vsub.f32 %v492, %v657
        %v667 = vsub.f32 %v495, %v657
        %v668 = vsub.f32 %v500, %v657
        %v669 = vsub.f32 %v503, %v657
        %v670 = vsub.f32 %v508, %v657
        %v671 = vsub.f32 %v511, %v657
        %v672 = vsub.f32 %v516, %v657
        %v673 = vsub.f32 %v519, %v657
        %v674 = vsub.f32 %v524, %v657
        %v675 = vsub.f32 %v527, %v657
        %v676 = vsub.f32 %v532, %v657
        %v677 = vsub.f32 %v535, %v657
        %v678 = vsub.f32 %v540, %v657
        %v679 = vsub.f32 %v543, %v657
        %v680 = vsub.f32 %v548, %v657
        %v681 = vsub.f32 %v551, %v657
        %v682 = vsub.f32 %v556, %v657
        %v683 = vsub.f32 %v559, %v657
        %v684 = vsub.f32 %v564, %v657
        %v685 = vsub.f32 %v567, %v657
        %v686 = vsub.f32 %v572, %v657
        %v687 = vsub.f32 %v575, %v657
        %v688 = vsub.f32 %v580, %v657
        %v689 = vsub.f32 %v583, %v657
        %v690 = vmul.f32 %v658, %v658
        %v691 = vmul.f32 %v659, %v659
        %v692 = vmul.f32 %v660, %v660
        %v693 = vmul.f32 %v661, %v661
        %v694 = vmul.f32 %v662, %v662
        %v695 = vmul.f32 %v663, %v663
        %v696 = vmul.f32 %v664, %v664
        %v697 = vmul.f32 %v665, %v665
        %v698 = vmul.f32 %v666, %v666
        %v699 = vmul.f32 %v667, %v667
        %v700 = vmul.f32 %v668, %v668
        %v701 = vmul.f32 %v669, %v669
        %v702 = vmul.f32 %v670, %v670
        %v703 = vmul.f32 %v671, %v671
        %v704 = vmul.f32 %v672, %v672
        %v705 = vmul.f32 %v673, %v673
        %v706 = vmul.f32 %v674, %v674
        %v707 = vmul.f32 %v675, %v675
        %v708 = vmul.f32 %v676, %v676
        %v709 = vmul.f32 %v677, %v677
        %v710 = vmul.f32 %v678, %v678
        %v711 = vmul.f32 %v679, %v679
        %v712 = vmul.f32 %v680, %v680
        %v713 = vmul.f32 %v681, %v681
        %v714 = vmul.f32 %v682, %v682
        %v715 = vmul.f32 %v683, %v683
        %v716 = vmul.f32 %v684, %v684
        %v717 = vmul.f32 %v685, %v685
        %v718 = vmul.f32 %v686, %v686
        %v719 = vmul.f32 %v687, %v687
        %v720 = vmul.f32 %v688, %v688
        %v721 = vmul.f32 %v689, %v689
        %v722 = vsel %vm586, %v690, 0.0
        %v723 = vsel %vm586, %v691, 0.0
        %v724 = vadd.f32 %v722, %v723
        %v725 = vsel %vm586, %v692, 0.0
        %v726 = vadd.f32 %v724, %v725
        %v727 = vsel %vm586, %v693, 0.0
        %v728 = vadd.f32 %v726, %v727
        %v729 = vsel %vm586, %v694, 0.0
        %v730 = vadd.f32 %v728, %v729
        %v731 = vsel %vm586, %v695, 0.0
        %v732 = vadd.f32 %v730, %v731
        %v733 = vsel %vm586, %v696, 0.0
        %v734 = vadd.f32 %v732, %v733
        %v735 = vsel %vm586, %v697, 0.0
        %v736 = vadd.f32 %v734, %v735
        %v737 = vsel %vm586, %v698, 0.0
        %v738 = vadd.f32 %v736, %v737
        %v739 = vsel %vm586, %v699, 0.0
        %v740 = vadd.f32 %v738, %v739
        %v741 = vsel %vm586, %v700, 0.0
        %v742 = vadd.f32 %v740, %v741
        %v743 = vsel %vm586, %v701, 0.0
        %v744 = vadd.f32 %v742, %v743
        %v745 = vsel %vm586, %v702, 0.0
        %v746 = vadd.f32 %v744, %v745
        %v747 = vsel %vm586, %v703, 0.0
        %v748 = vadd.f32 %v746, %v747
        %v749 = vsel %vm586, %v704, 0.0
        %v750 = vadd.f32 %v748, %v749
        %v751 = vsel %vm586, %v705, 0.0
        %v752 = vadd.f32 %v750, %v751
        %v753 = vsel %vm586, %v706, 0.0
        %v754 = vadd.f32 %v752, %v753
        %v755 = vsel %vm586, %v707, 0.0
        %v756 = vadd.f32 %v754, %v755
        %v757 = vsel %vm586, %v708, 0.0
        %v758 = vadd.f32 %v756, %v757
        %v759 = vsel %vm586, %v709, 0.0
        %v760 = vadd.f32 %v758, %v759
        %v761 = vsel %vm586, %v710, 0.0
        %v762 = vadd.f32 %v760, %v761
        %v763 = vsel %vm586, %v711, 0.0
        %v764 = vadd.f32 %v762, %v763
        %v765 = vsel %vm586, %v712, 0.0
        %v766 = vadd.f32 %v764, %v765
        %v767 = vsel %vm586, %v713, 0.0
        %v768 = vadd.f32 %v766, %v767
        %v769 = vsel %vm586, %v714, 0.0
        %v770 = vadd.f32 %v768, %v769
        %v771 = vsel %vm586, %v715, 0.0
        %v772 = vadd.f32 %v770, %v771
        %v773 = vsel %vm586, %v716, 0.0
        %v774 = vadd.f32 %v772, %v773
        %v775 = vsel %vm586, %v717, 0.0
        %v776 = vadd.f32 %v774, %v775
        %v777 = vsel %vm586, %v718, 0.0
        %v778 = vadd.f32 %v776, %v777
        %v779 = vsel %vm586, %v719, 0.0
        %v780 = vadd.f32 %v778, %v779
        %v781 = vsel %vm586, %v720, 0.0
        %v782 = vadd.f32 %v780, %v781
        %v783 = vsel %vm586, %v721, 0.0
        %v784 = vadd.f32 %v782, %v783
        %v785 = vrot.slane %v784, 4
        %v786 = vadd.f32 %v784, %v785
        %v787 = vrot.slane %v786, 2
        %v788 = vadd.f32 %v786, %v787
        %v789 = vrot.slane %v788, 1
        %v790 = vadd.f32 %v788, %v789
        %v791 = vmul.f32 %v790, %v656
        %v792 = vadd.f32 %v791, 1e-05
        %v793 = vrsqrt.pop %v792
        %v794 = vmul.f32 %v658, %v793
        %v795 = vmul.f32 %v659, %v793
        %v796 = vmul.f32 %v660, %v793
        %v797 = vmul.f32 %v661, %v793
        %v798 = vmul.f32 %v662, %v793
        %v799 = vmul.f32 %v663, %v793
        %v800 = vmul.f32 %v664, %v793
        %v801 = vmul.f32 %v665, %v793
        %v802 = vmul.f32 %v666, %v793
        %v803 = vmul.f32 %v667, %v793
        %v804 = vmul.f32 %v668, %v793
        %v805 = vmul.f32 %v669, %v793
        %v806 = vmul.f32 %v670, %v793
        %v807 = vmul.f32 %v671, %v793
        %v808 = vmul.f32 %v672, %v793
        %v809 = vmul.f32 %v673, %v793
        %v810 = vmul.f32 %v674, %v793
        %v811 = vmul.f32 %v675, %v793
        %v812 = vmul.f32 %v676, %v793
        %v813 = vmul.f32 %v677, %v793
        %v814 = vmul.f32 %v678, %v793
        %v815 = vmul.f32 %v679, %v793
        %v816 = vmul.f32 %v680, %v793
        %v817 = vmul.f32 %v681, %v793
        %v818 = vmul.f32 %v682, %v793
        %v819 = vmul.f32 %v683, %v793
        %v820 = vmul.f32 %v684, %v793
        %v821 = vmul.f32 %v685, %v793
        %v822 = vmul.f32 %v686, %v793
        %v823 = vmul.f32 %v687, %v793
        %v824 = vmul.f32 %v688, %v793
        %v825 = vmul.f32 %v689, %v793
        %v826 = vmax.f32 %v794, 0.0
        %v827 = vmax.f32 %v795, 0.0
        %v828 = vmax.f32 %v796, 0.0
        %v829 = vmax.f32 %v797, 0.0
        %v830 = vmax.f32 %v798, 0.0
        %v831 = vmax.f32 %v799, 0.0
        %v832 = vmax.f32 %v800, 0.0
        %v833 = vmax.f32 %v801, 0.0
        %v834 = vmax.f32 %v802, 0.0
        %v835 = vmax.f32 %v803, 0.0
        %v836 = vmax.f32 %v804, 0.0
        %v837 = vmax.f32 %v805, 0.0
        %v838 = vmax.f32 %v806, 0.0
        %v839 = vmax.f32 %v807, 0.0
        %v840 = vmax.f32 %v808, 0.0
        %v841 = vmax.f32 %v809, 0.0
        %v842 = vmax.f32 %v810, 0.0
        %v843 = vmax.f32 %v811, 0.0
        %v844 = vmax.f32 %v812, 0.0
        %v845 = vmax.f32 %v813, 0.0
        %v846 = vmax.f32 %v814, 0.0
        %v847 = vmax.f32 %v815, 0.0
        %v848 = vmax.f32 %v816, 0.0
        %v849 = vmax.f32 %v817, 0.0
        %v850 = vmax.f32 %v818, 0.0
        %v851 = vmax.f32 %v819, 0.0
        %v852 = vmax.f32 %v820, 0.0
        %v853 = vmax.f32 %v821, 0.0
        %v854 = vmax.f32 %v822, 0.0
        %v855 = vmax.f32 %v823, 0.0
        %v856 = vmax.f32 %v824, 0.0
        %v857 = vmax.f32 %v825, 0.0
        %858 = vst.msk [vmem:[%s188] sm:$0xff] %vm586, %v826
        %859 = vst.msk [vmem:[%s188 + $0x8] sm:$0xff] %vm586, %v827
        %860 = vst.msk [vmem:[%s188 + $0x10] sm:$0xff] %vm586, %v828
        %861 = vst.msk [vmem:[%s188 + $0x18] sm:$0xff] %vm586, %v829
        %862 = vst.msk [vmem:[%s188 + $0x20] sm:$0xff] %vm586, %v830
        %863 = vst.msk [vmem:[%s188 + $0x28] sm:$0xff] %vm586, %v831
        %864 = vst.msk [vmem:[%s188 + $0x30] sm:$0xff] %vm586, %v832
        %865 = vst.msk [vmem:[%s188 + $0x38] sm:$0xff] %vm586, %v833
        %866 = vst.msk [vmem:[%s188 + $0x40] sm:$0xff] %vm586, %v834
        %867 = vst.msk [vmem:[%s188 + $0x48] sm:$0xff] %vm586, %v835
        %868 = vst.msk [vmem:[%s188 + $0x50] sm:$0xff] %vm586, %v836
        %869 = vst.msk [vmem:[%s188 + $0x58] sm:$0xff] %vm586, %v837
        %870 = vst.msk [vmem:[%s188 + $0x60] sm:$0xff] %vm586, %v838
        %871 = vst.msk [vmem:[%s188 + $0x68] sm:$0xff] %vm586, %v839
        %872 = vst.msk [vmem:[%s188 + $0x70] sm:$0xff] %vm586, %v840
        %873 = vst.msk [vmem:[%s188 + $0x78] sm:$0xff] %vm586, %v841
        %874 = vst.msk [vmem:[%s188 + $0x80] sm:$0xff] %vm586, %v842
        %875 = vst.msk [vmem:[%s188 + $0x88] sm:$0xff] %vm586, %v843
        %876 = vst.msk [vmem:[%s188 + $0x90] sm:$0xff] %vm586, %v844
        %877 = vst.msk [vmem:[%s188 + $0x98] sm:$0xff] %vm586, %v845
        %878 = vst.msk [vmem:[%s188 + $0xa0] sm:$0xff] %vm586, %v846
        %879 = vst.msk [vmem:[%s188 + $0xa8] sm:$0xff] %vm586, %v847
        %880 = vst.msk [vmem:[%s188 + $0xb0] sm:$0xff] %vm586, %v848
        %881 = vst.msk [vmem:[%s188 + $0xb8] sm:$0xff] %vm586, %v849
        %882 = vst.msk [vmem:[%s188 + $0xc0] sm:$0xff] %vm586, %v850
        %883 = vst.msk [vmem:[%s188 + $0xc8] sm:$0xff] %vm586, %v851
        %884 = vst.msk [vmem:[%s188 + $0xd0] sm:$0xff] %vm586, %v852
        %885 = vst.msk [vmem:[%s188 + $0xd8] sm:$0xff] %vm586, %v853
        %886 = vst.msk [vmem:[%s188 + $0xe0] sm:$0xff] %vm586, %v854
        %887 = vst.msk [vmem:[%s188 + $0xe8] sm:$0xff] %vm586, %v855
        %888 = vst.msk [vmem:[%s188 + $0xf0] sm:$0xff] %vm586, %v856
        %889 = vst.msk [vmem:[%s188 + $0xf8] sm:$0xff] %vm586, %v857
        %s890 = sand.u32 %s96, 1
        %s891 = scalar_lea.sflag [#allocation4], %s890
        %s892 = sand.u32 %s96, 1
        %s893 = smul.addr %s892, 256
        %s894 = scalar_lea.vmem [#allocation5], %s893
        // Predicated region
        $region37: #{tpu_custom_call.1} parent=31 // pred_check
          %p895 = pneg %p106
        $region38: #{tpu_custom_call.1} parent=31 // pred_check_branch
          %897 = sbr.rel (%p895) target = $region40
        $region39: #{tpu_custom_call.1} parent=31 // pred_region
          %s899 = ssub.s32 4096, 4096
          %900 = vsyncadd %s891, %s899
          %s901 = smul.addr %s20, 32
          %s902 = smul.addr %s901, 128
          %s903 = scalar_lea.hbm %s3, %s902
          %s904 = sshll.u32 %s894, 4
          %s905 = int_to_ptr.vmem [resolvable:$true] %s904
          %910 = dma.vmem_to_hbm [thread:$0]  %s905, 4096, %s903, %s891, 128, 128, 8
        $region40: #{tpu_custom_call.1} parent=31 // pred_fallthru
          _
      $region32: #{tpu_custom_call.1} parent=5 // pred_fallthru
        _
      %p911 = scmp.le.s32.totalorder 2, %s15
      // Predicated region
      $region41: #{tpu_custom_call.1} parent=5 // pred_check
        %p912 = pneg %p911
      $region42: #{tpu_custom_call.1} parent=5 // pred_check_branch
        %914 = sbr.rel (%p912) target = $region44
      $region43: #{tpu_custom_call.1} parent=5 // pred_region
        %s915 = ssub.s32 %s15, 2
        // Predicated region
        $region45: #{tpu_custom_call.1} parent=43 // pred_check
          %p916 = pneg %p112
        $region46: #{tpu_custom_call.1} parent=43 // pred_check_branch
          %918 = sbr.rel (%p916) target = $region48
        $region47: #{tpu_custom_call.1} parent=43 // pred_region
          %s919 = sand.u32 %s97, 1
          %s920 = scalar_lea.sflag [#allocation4], %s919
          %s921 = sand.u32 %s97, 1
          %s922 = smul.addr %s921, 256
          %s923 = scalar_lea.vmem [#allocation5], %s922
          %924 = dma.done %s920, 4096
        $region48: #{tpu_custom_call.1} parent=43 // pred_fallthru
          _
      $region44: #{tpu_custom_call.1} parent=5 // pred_fallthru
        _
    $region6: #{tpu_custom_call.1} parent=1 // loop_footer
      %s19 = sadd.s32 1, %s15
    $region7: #{tpu_custom_call.1} parent=1 // loop_footer_branch
      %14 = sbr.rel target = $region3
    $region8: #{tpu_custom_call.1} parent=1 // loop_exit
      _
    %925 = vsyncpa [#allocation3], 1
    %s926 = scalar_lea.sflag [#allocation3], 1
    %927 = vsyncpa %s926, 1
    %928 = vsyncpa [#allocation4], 1
    %s929 = scalar_lea.sflag [#allocation4], 1
    %930 = vsyncpa %s929, 1

</llo_original>
